<compile_context>
chip_gen: v7x
topology: tpu7x:2x2x1
jax: 0.10.0
libtpu: 0.0.40
codegen_flags: <defaults>
</compile_context>

<pallas_src>
import functools
import math

import jax
import jax.numpy as jnp
from jax.experimental import pallas as pl
from jax.experimental.pallas import tpu as pltpu


def _round_up(x: int, m: int) -> int:
    return ((x + m - 1) // m) * m


def _fmetf_kernel(x_ref, wg_ref, wcat_ref, cflat_ref, o_ref, *, n_exps, d_out):
    x = x_ref[...]                                                       # (TM, d_in) f32

    # --- gating: softmax(x @ w_gate) over experts (eval path: no noise) ---
    logits = jnp.dot(x, wg_ref[...], preferred_element_type=jnp.float32)  # (TM, E)
    m = jnp.max(logits, axis=-1, keepdims=True)
    e = jnp.exp(logits - m)
    gates = e / jnp.sum(e, axis=-1, keepdims=True)                        # (TM, E)

    # --- all experts in one matmul: x @ [W_0^T | ... | W_{E-1}^T] - [b_i @ W_i^T]_i ---
    y = jnp.dot(x, wcat_ref[...], preferred_element_type=jnp.float32)     # (TM, E*d_out)
    y = y - cflat_ref[...]                                                # fold (x - b_i) @ W_i^T

    # --- weighted sum over experts (E is a small static constant) ---
    acc = gates[:, 0:1] * y[:, 0:d_out]
    for i in range(1, n_exps):
        acc = acc + gates[:, i:i + 1] * y[:, i * d_out:(i + 1) * d_out]
    o_ref[...] = acc.astype(o_ref.dtype)


def fmetf_layer(x, w_gate, w_noise, expert_bias, expert_weight, *, tm=128):
    """Eval-mode forward of FMETFLayer.

    x:             (..., d_in) float32
    w_gate:        (d_in, E)
    w_noise:       (d_in, E)      (unused in eval; kept for API parity)
    expert_bias:   (E, d_in)      PWLayer.bias per expert
    expert_weight: (E, d_out, d_in)  PWLayer.lin.weight per expert (torch Linear layout)
    returns:       (..., d_out) float32
    """
    del w_noise  # only used in training-mode noisy gating
    *lead, d_in = x.shape
    n_exps, d_out, d_in_w = expert_weight.shape
    assert d_in_w == d_in and w_gate.shape == (d_in, n_exps)

    n = math.prod(lead) if lead else 1
    x2 = x.reshape(n, d_in).astype(jnp.float32)

    # Fold expert weights: columns [i*d_out:(i+1)*d_out] of w_cat are W_i^T.
    w_cat = jnp.transpose(expert_weight, (2, 0, 1)).reshape(d_in, n_exps * d_out)
    w_cat = w_cat.astype(jnp.float32)
    # Per-expert bias contribution b_i @ W_i^T, flattened to (1, E*d_out).
    c_flat = jnp.einsum('ed,eod->eo', expert_bias, expert_weight)
    c_flat = c_flat.reshape(1, n_exps * d_out).astype(jnp.float32)

    # Token tiling: up to `tm` rows per grid step; pad N so blocks tile evenly.
    tm_eff = min(tm, _round_up(n, 8))
    n_pad = _round_up(n, tm_eff)
    if n_pad != n:
        x2 = jnp.pad(x2, ((0, n_pad - n), (0, 0)))
    grid = (n_pad // tm_eff,)

    kernel = functools.partial(_fmetf_kernel, n_exps=n_exps, d_out=d_out)
    out = pl.pallas_call(
        kernel,
        out_shape=jax.ShapeDtypeStruct((n_pad, d_out), jnp.float32),
        grid_spec=pltpu.PrefetchScalarGridSpec(
            num_scalar_prefetch=0,
            grid=grid,
            in_specs=[
                pl.BlockSpec((tm_eff, d_in), lambda i: (i, 0)),            # x tokens
                pl.BlockSpec((d_in, n_exps), lambda i: (0, 0)),            # w_gate (resident)
                pl.BlockSpec((d_in, n_exps * d_out), lambda i: (0, 0)),    # fused expert weights
                pl.BlockSpec((1, n_exps * d_out), lambda i: (0, 0)),       # folded bias row
            ],
            out_specs=pl.BlockSpec((tm_eff, d_out), lambda i: (i, 0)),
        ),
        compiler_params=pltpu.CompilerParams(
            dimension_semantics=("parallel",)),
    )(x2, w_gate.astype(jnp.float32), w_cat, c_flat)

    return out[:n].reshape(tuple(lead) + (d_out,))


def _reference(x, w_gate, w_noise, expert_bias, expert_weight):
    """Pure-JAX mirror of FMETFLayer.forward in eval mode."""
    del w_noise
    gates = jax.nn.softmax(x @ w_gate, axis=-1)                    # (..., E)
    xe = x[..., None, :] - expert_bias                             # (..., E, d_in)
    eo = jnp.einsum('...ed,eod->...eo', xe, expert_weight)         # (..., E, d_out)
    return jnp.sum(gates[..., None] * eo, axis=-2)                 # (..., d_out)


if __name__ == "__main__":
    batch, seq_len, d_in, d_out, n_exps = 2, 8, 64, 32, 8

    key = jax.random.PRNGKey(0)
    kx, kg, kb, kw = jax.random.split(key, 4)
    x = jax.random.normal(kx, (batch, seq_len, d_in), dtype=jnp.float32)
    # non-zero gate weights so the gating path is actually exercised
    w_gate = jax.random.normal(kg, (d_in, n_exps), dtype=jnp.float32) * 0.02
    w_noise = jnp.zeros((d_in, n_exps), jnp.float32)  # eval path: unused
    expert_bias = jax.random.normal(kb, (n_exps, d_in), dtype=jnp.float32) * 0.02
    expert_weight = jax.random.normal(kw, (n_exps, d_out, d_in), dtype=jnp.float32) * 0.02

    out = fmetf_layer(x, w_gate, w_noise, expert_bias, expert_weight)
    out = jax.block_until_ready(out)

    ref = _reference(x, w_gate, w_noise, expert_bias, expert_weight)
    if not jnp.allclose(out, ref, atol=1e-4, rtol=1e-4):
        max_err = jnp.max(jnp.abs(out - ref))
        raise AssertionError(f"Pallas kernel does not match reference (max abs err {max_err})")
    print("KERNEL_OK")
</pallas_src>

<mosaic_0001>
module attributes {stable_mosaic.version = 11 : i64} {
  func.func @_fmetf_kernel(%arg0: i32, %arg1: memref<16x64xf32, #tpu.memory_space<vmem>>, %arg2: memref<64x8xf32, #tpu.memory_space<vmem>>, %arg3: memref<64x256xf32, #tpu.memory_space<vmem>>, %arg4: memref<1x256xf32, #tpu.memory_space<vmem>>, %arg5: memref<16x32xf32, #tpu.memory_space<vmem>>) attributes {dimension_semantics = [#tpu.dimension_semantics<parallel>], iteration_bounds = array<i64: 1>, scalar_prefetch = 0 : i64, scratch_operands = 0 : i64, tpu.core_type = #tpu.core_type<tc>, window_params = [{transform_indices = @transform_0, window_bounds = array<i64: 16, 64>}, {pipeline_mode = #tpu.pipeline_mode<synchronous>, transform_indices = @transform_1, window_bounds = array<i64: 64, 8>}, {pipeline_mode = #tpu.pipeline_mode<synchronous>, transform_indices = @transform_2, window_bounds = array<i64: 64, 256>}, {pipeline_mode = #tpu.pipeline_mode<synchronous>, transform_indices = @transform_3, window_bounds = array<i64: 1, 256>}, {transform_indices = @transform_4, window_bounds = array<i64: 16, 32>}]} {
    %c0 = arith.constant 0 : index
    %c0_0 = arith.constant 0 : index
    %0 = vector.load %arg1[%c0, %c0_0] : memref<16x64xf32, #tpu.memory_space<vmem>>, vector<16x64xf32>
    %c0_1 = arith.constant 0 : index
    %c0_2 = arith.constant 0 : index
    %1 = vector.load %arg2[%c0_1, %c0_2] : memref<64x8xf32, #tpu.memory_space<vmem>>, vector<64x8xf32>
    %cst = arith.constant dense<0.000000e+00> : vector<16x8xf32>
    %2 = tpu.matmul %0, %1, %cst {dimension_numbers = #tpu.dot_dimension_numbers<[1], [0], [0], [1], [0, 0, 1, 1], [], []>} : vector<16x64xf32>, vector<64x8xf32>, vector<16x8xf32> -> vector<16x8xf32>
    %cst_3 = arith.constant dense<0xFF800000> : vector<16xf32>
    %3 = vector.multi_reduction <maximumf>, %2, %cst_3 [1] : vector<16x8xf32> to vector<16xf32>
    %4 = vector.shape_cast %3 : vector<16xf32> to vector<16x1xf32>
    %5 = vector.broadcast %4 : vector<16x1xf32> to vector<16x8xf32>
    %6 = arith.subf %2, %5 : vector<16x8xf32>
    %7 = math.exp %6 : vector<16x8xf32>
    %cst_4 = arith.constant dense<0.000000e+00> : vector<16xf32>
    %8 = vector.multi_reduction <add>, %7, %cst_4 [1] : vector<16x8xf32> to vector<16xf32>
    %9 = vector.shape_cast %8 : vector<16xf32> to vector<16x1xf32>
    %10 = vector.broadcast %9 : vector<16x1xf32> to vector<16x8xf32>
    %11 = arith.divf %7, %10 : vector<16x8xf32>
    %c0_5 = arith.constant 0 : index
    %c0_6 = arith.constant 0 : index
    %12 = vector.load %arg3[%c0_5, %c0_6] : memref<64x256xf32, #tpu.memory_space<vmem>>, vector<64x256xf32>
    %cst_7 = arith.constant dense<0.000000e+00> : vector<16x256xf32>
    %13 = tpu.matmul %0, %12, %cst_7 {dimension_numbers = #tpu.dot_dimension_numbers<[1], [0], [0], [1], [0, 0, 1, 1], [], []>} : vector<16x64xf32>, vector<64x256xf32>, vector<16x256xf32> -> vector<16x256xf32>
    %c0_8 = arith.constant 0 : index
    %c0_9 = arith.constant 0 : index
    %14 = vector.load %arg4[%c0_8, %c0_9] : memref<1x256xf32, #tpu.memory_space<vmem>>, vector<1x256xf32>
    %15 = vector.broadcast %14 : vector<1x256xf32> to vector<16x256xf32>
    %16 = arith.subf %13, %15 : vector<16x256xf32>
    %17 = vector.extract_strided_slice %11 {offsets = [0, 0], sizes = [16, 1], strides = [1, 1]} : vector<16x8xf32> to vector<16x1xf32>
    %18 = vector.extract_strided_slice %16 {offsets = [0, 0], sizes = [16, 32], strides = [1, 1]} : vector<16x256xf32> to vector<16x32xf32>
    %19 = vector.broadcast %17 : vector<16x1xf32> to vector<16x32xf32>
    %20 = arith.mulf %19, %18 : vector<16x32xf32>
    %21 = vector.extract_strided_slice %11 {offsets = [0, 1], sizes = [16, 1], strides = [1, 1]} : vector<16x8xf32> to vector<16x1xf32>
    %22 = vector.extract_strided_slice %16 {offsets = [0, 32], sizes = [16, 32], strides = [1, 1]} : vector<16x256xf32> to vector<16x32xf32>
    %23 = vector.broadcast %21 : vector<16x1xf32> to vector<16x32xf32>
    %24 = arith.mulf %23, %22 : vector<16x32xf32>
    %25 = arith.addf %20, %24 : vector<16x32xf32>
    %26 = vector.extract_strided_slice %11 {offsets = [0, 2], sizes = [16, 1], strides = [1, 1]} : vector<16x8xf32> to vector<16x1xf32>
    %27 = vector.extract_strided_slice %16 {offsets = [0, 64], sizes = [16, 32], strides = [1, 1]} : vector<16x256xf32> to vector<16x32xf32>
    %28 = vector.broadcast %26 : vector<16x1xf32> to vector<16x32xf32>
    %29 = arith.mulf %28, %27 : vector<16x32xf32>
    %30 = arith.addf %25, %29 : vector<16x32xf32>
    %31 = vector.extract_strided_slice %11 {offsets = [0, 3], sizes = [16, 1], strides = [1, 1]} : vector<16x8xf32> to vector<16x1xf32>
    %32 = vector.extract_strided_slice %16 {offsets = [0, 96], sizes = [16, 32], strides = [1, 1]} : vector<16x256xf32> to vector<16x32xf32>
    %33 = vector.broadcast %31 : vector<16x1xf32> to vector<16x32xf32>
    %34 = arith.mulf %33, %32 : vector<16x32xf32>
    %35 = arith.addf %30, %34 : vector<16x32xf32>
    %36 = vector.extract_strided_slice %11 {offsets = [0, 4], sizes = [16, 1], strides = [1, 1]} : vector<16x8xf32> to vector<16x1xf32>
    %37 = vector.extract_strided_slice %16 {offsets = [0, 128], sizes = [16, 32], strides = [1, 1]} : vector<16x256xf32> to vector<16x32xf32>
    %38 = vector.broadcast %36 : vector<16x1xf32> to vector<16x32xf32>
    %39 = arith.mulf %38, %37 : vector<16x32xf32>
    %40 = arith.addf %35, %39 : vector<16x32xf32>
    %41 = vector.extract_strided_slice %11 {offsets = [0, 5], sizes = [16, 1], strides = [1, 1]} : vector<16x8xf32> to vector<16x1xf32>
    %42 = vector.extract_strided_slice %16 {offsets = [0, 160], sizes = [16, 32], strides = [1, 1]} : vector<16x256xf32> to vector<16x32xf32>
    %43 = vector.broadcast %41 : vector<16x1xf32> to vector<16x32xf32>
    %44 = arith.mulf %43, %42 : vector<16x32xf32>
    %45 = arith.addf %40, %44 : vector<16x32xf32>
    %46 = vector.extract_strided_slice %11 {offsets = [0, 6], sizes = [16, 1], strides = [1, 1]} : vector<16x8xf32> to vector<16x1xf32>
    %47 = vector.extract_strided_slice %16 {offsets = [0, 192], sizes = [16, 32], strides = [1, 1]} : vector<16x256xf32> to vector<16x32xf32>
    %48 = vector.broadcast %46 : vector<16x1xf32> to vector<16x32xf32>
    %49 = arith.mulf %48, %47 : vector<16x32xf32>
    %50 = arith.addf %45, %49 : vector<16x32xf32>
    %51 = vector.extract_strided_slice %11 {offsets = [0, 7], sizes = [16, 1], strides = [1, 1]} : vector<16x8xf32> to vector<16x1xf32>
    %52 = vector.extract_strided_slice %16 {offsets = [0, 224], sizes = [16, 32], strides = [1, 1]} : vector<16x256xf32> to vector<16x32xf32>
    %53 = vector.broadcast %51 : vector<16x1xf32> to vector<16x32xf32>
    %54 = arith.mulf %53, %52 : vector<16x32xf32>
    %55 = arith.addf %50, %54 : vector<16x32xf32>
    %c0_10 = arith.constant 0 : index
    %c0_11 = arith.constant 0 : index
    %56 = vector.load %arg5[%c0_10, %c0_11] : memref<16x32xf32, #tpu.memory_space<vmem>>, vector<16x32xf32>
    tpu.vector_store %arg5[%c0_10, %c0_11], %55 {strides = array<i32>} : memref<16x32xf32, #tpu.memory_space<vmem>>, vector<16x32xf32>,
    return
  }
  func.func @transform_0(%arg0: i32) -> (i32, i32) {
    %c0_i32 = arith.constant 0 : i32
    %c0_i32_0 = arith.constant 0 : i32
    return %arg0, %c0_i32 : i32, i32
  }
  func.func @transform_1(%arg0: i32) -> (i32, i32) {
    %c0_i32 = arith.constant 0 : i32
    %c0_i32_0 = arith.constant 0 : i32
    %c0_i32_1 = arith.constant 0 : i32
    return %c0_i32, %c0_i32_0 : i32, i32
  }
  func.func @transform_2(%arg0: i32) -> (i32, i32) {
    %c0_i32 = arith.constant 0 : i32
    %c0_i32_0 = arith.constant 0 : i32
    %c0_i32_1 = arith.constant 0 : i32
    return %c0_i32, %c0_i32_0 : i32, i32
  }
  func.func @transform_3(%arg0: i32) -> (i32, i32) {
    %c0_i32 = arith.constant 0 : i32
    %c0_i32_0 = arith.constant 0 : i32
    %c0_i32_1 = arith.constant 0 : i32
    return %c0_i32, %c0_i32_0 : i32, i32
  }
  func.func @transform_4(%arg0: i32) -> (i32, i32) {
    %c0_i32 = arith.constant 0 : i32
    %c0_i32_0 = arith.constant 0 : i32
    return %arg0, %c0_i32 : i32, i32
  }
}

</mosaic_0001>

<llo_original>
// kernel: tpu_custom_call.1
$region0: #{tpu_custom_call.1}
  #allocation0 [shape = 'u32[]', space=smem, size = 0x4, offset = 0x4, fixed_abs, tag = 'smem constant byte address 0x4 - core index']
  #allocation1 [shape = 'u32[144,128]{1,0:T(1,128)}', space=vmem, size = 0x12000, scoped, tag = 'internal scratch']
  %s0 = inlined_call_operand.vmem [shape: f32[16,64], index: 0, kind: input, shape index: {}]
  %s1 = inlined_call_operand.vmem [shape: f32[64,8], index: 1, kind: input, shape index: {}]
  %s2 = inlined_call_operand.hbm [shape: f32[64,256], index: 2, kind: input, shape index: {}]
  %s3 = inlined_call_operand.vmem [shape: f32[1,256], index: 3, kind: input, shape index: {}]
  %s4 = inlined_call_operand.hbm [shape: f32[16,32], index: 4, kind: output, shape index: {}]
  %s5 = sld [smem:[#allocation0]]
  $region30: #{tpu_custom_call.1} parent=0
    _
  %s7 = ssub.s32 1, %s5
  %s8 = scalar_select 0, %s7, %s5
  $region1: #{tpu_custom_call.1} parent=0
    #allocation2 [shape = 'u8[65536]{0}', space=vmem, size = 0x10000, scoped, tag = 'input window, operand 2, single buffered']
    #allocation3 [shape = 's32[1]{0}', space=sflag, size = 0x4, scoped, tag = 'scoped memory for tpu_custom_call.1']
    #allocation4 [shape = 's32[1]{0}', space=sflag, size = 0x4, scoped, tag = 'scoped memory for tpu_custom_call.1']
    #allocation5 [shape = 'u8[8192]{0}', space=vmem, size = 0x2000, scoped, tag = 'output window, operand 0, single buffered']
    %9 = vsyncpa [#allocation3], 0
    %10 = vsyncpa [#allocation4], 0
    // Predicated region
    $region2: #{tpu_custom_call.1} parent=1 // pred_check
      _
    $region3: #{tpu_custom_call.1} parent=1 // pred_check_branch
      %12 = sbr.rel (0) target = $region5
    $region4: #{tpu_custom_call.1} parent=1 // pred_region
      _
    $region5: #{tpu_custom_call.1} parent=1 // pred_fallthru
      _
    // Predicated region
    $region6: #{tpu_custom_call.1} parent=1 // pred_check
      _
    $region7: #{tpu_custom_call.1} parent=1 // pred_check_branch
      %14 = sbr.rel (0) target = $region9
    $region8: #{tpu_custom_call.1} parent=1 // pred_region
      _
    $region9: #{tpu_custom_call.1} parent=1 // pred_fallthru
      _
    // Predicated region
    $region10: #{tpu_custom_call.1} parent=1 // pred_check
      _
    $region11: #{tpu_custom_call.1} parent=1 // pred_check_branch
      %16 = sbr.rel (0) target = $region13
    $region12: #{tpu_custom_call.1} parent=1 // pred_region
      %s18 = ssub.s32 2048, 2048
      %19 = vsyncadd [#allocation3], %s18
      %s20 = sshll.u32 [#allocation2], 4
      %s21 = int_to_ptr.vmem [resolvable:$true] %s20
      %26 = dma.hbm_to_vmem [thread:$0]  %s2, 2048, %s21, [#allocation3], 256, 256, 16
    $region13: #{tpu_custom_call.1} parent=1 // pred_fallthru
      _
    // Predicated region
    $region14: #{tpu_custom_call.1} parent=1 // pred_check
      _
    $region15: #{tpu_custom_call.1} parent=1 // pred_check_branch
      %28 = sbr.rel (0) target = $region17
    $region16: #{tpu_custom_call.1} parent=1 // pred_region
      _
    $region17: #{tpu_custom_call.1} parent=1 // pred_fallthru
      _
    // Predicated region
    $region18: #{tpu_custom_call.1} parent=1 // pred_check
      _
    $region19: #{tpu_custom_call.1} parent=1 // pred_check_branch
      %30 = sbr.rel (0) target = $region21
    $region20: #{tpu_custom_call.1} parent=1 // pred_region
      %31 = dma.done [#allocation3], 2048
    $region21: #{tpu_custom_call.1} parent=1 // pred_fallthru
      _
    %v32 = vld [vmem:[%s0] sm:$0xff]
    %v33 = vld [vmem:[%s0 + $0x8] sm:$0xff]
    %v34 = vld [vmem:[%s1] sm:$0xff]
    %v35 = vld [vmem:[%s1 + $0x8] sm:$0xff]
    %v36 = vld [vmem:[%s1 + $0x10] sm:$0xff]
    %v37 = vld [vmem:[%s1 + $0x18] sm:$0xff]
    %v38 = vld [vmem:[%s1 + $0x20] sm:$0xff]
    %v39 = vld [vmem:[%s1 + $0x28] sm:$0xff]
    %v40 = vld [vmem:[%s1 + $0x30] sm:$0xff]
    %v41 = vld [vmem:[%s1 + $0x38] sm:$0xff]
    %vm42 = vcmask 523264
    %v44 = vsel %vm42, %v32, 0
    %v47 = vsel %vm42, %v33, 0
    %49 = vmatprep.subr.mxu0 0.0
    %50 = vmatpush1.msra.mxu0 %v34
    %51 = vmatprep.subr.mxu0 0.0
    %52 = vmatpush1.msra.mxu0 %v35
    %53 = vmatprep.subr.mxu0 0.0
    %54 = vmatpush1.msra.mxu0 %v36
    %55 = vmatprep.subr.mxu0 0.0
    %56 = vmatpush1.msra.mxu0 %v37
    %57 = vmatprep.subr.mxu0 0.0
    %58 = vmatpush1.msra.mxu0 %v38
    %59 = vmatprep.subr.mxu0 0.0
    %60 = vmatpush1.msra.mxu0 %v39
    %61 = vmatprep.subr.mxu0 0.0
    %62 = vmatpush1.msra.mxu0 %v40
    %63 = vmatprep.subr.mxu0 0.0
    %64 = vmatpush1.msra.mxu0 %v41
    %65 = vmatprep.subr.mxu0 0.0
    %66 = vmatpush1.msra.mxu0 0.0
    %67 = vmatprep.subr.mxu0 0.0
    %68 = vmatpush1.msra.mxu0 0.0
    %69 = vmatprep.subr.mxu0 0.0
    %70 = vmatpush1.msra.mxu0 0.0
    %71 = vmatprep.subr.mxu0 0.0
    %72 = vmatpush1.msra.mxu0 0.0
    %73 = vmatprep.subr.mxu0 0.0
    %74 = vmatpush1.msra.mxu0 0.0
    %75 = vmatprep.subr.mxu0 0.0
    %76 = vmatpush1.msra.mxu0 0.0
    %77 = vmatprep.subr.mxu0 0.0
    %78 = vmatpush1.msra.mxu0 0.0
    %79 = vmatprep.subr.mxu0 0.0
    %80 = vmatpush1.msra.mxu0 0.0
    %81 = vmatprep.subr.mxu0 0.0
    %82 = vmatpush1.msra.mxu0 0.0
    %83 = vmatprep.subr.mxu0 0.0
    %84 = vmatpush1.msra.mxu0 0.0
    %85 = vmatprep.subr.mxu0 0.0
    %86 = vmatpush1.msra.mxu0 0.0
    %87 = vmatprep.subr.mxu0 0.0
    %88 = vmatpush1.msra.mxu0 0.0
    %89 = vmatprep.subr.mxu0 0.0
    %90 = vmatpush1.msra.mxu0 0.0
    %91 = vmatprep.subr.mxu0 0.0
    %92 = vmatpush1.msra.mxu0 0.0
    %93 = vmatprep.subr.mxu0 0.0
    %94 = vmatpush1.msra.mxu0 0.0
    %95 = vmatprep.subr.mxu0 0.0
    %96 = vmatpush1.msra.mxu0 0.0
    %97 = vmatprep.subr.mxu0 0.0
    %98 = vmatpush1.msra.mxu0 0.0
    %99 = vmatprep.subr.mxu0 0.0
    %100 = vmatpush1.msra.mxu0 0.0
    %101 = vmatprep.subr.mxu0 0.0
    %102 = vmatpush1.msra.mxu0 0.0
    %103 = vmatprep.subr.mxu0 0.0
    %104 = vmatpush1.msra.mxu0 0.0
    %105 = vmatprep.subr.mxu0 0.0
    %106 = vmatpush1.msra.mxu0 0.0
    %107 = vmatprep.subr.mxu0 0.0
    %108 = vmatpush1.msra.mxu0 0.0
    %109 = vmatprep.subr.mxu0 0.0
    %110 = vmatpush1.msra.mxu0 0.0
    %111 = vmatprep.subr.mxu0 0.0
    %112 = vmatpush1.msra.mxu0 0.0
    %113 = vmatprep.mubr.f32.mxu0 0.0
    %114 = vmatmul.mubr.f32.gmra.mrb[0].mxu0 %v44
    %v115 = vpop.f32.mrb[0].mxu0
    %v116 = vadd.f32 0.0, %v115
    %v117 = vpop.f32.mrb[0].mxu0
    %118 = vmatprep.mubr.f32.mxu0 0.0
    %119 = vmatmul.mubr.f32.gmra.mrb[0].mxu0 %v47
    %v120 = vpop.f32.mrb[0].mxu0
    %v121 = vadd.f32 0.0, %v120
    %v122 = vpop.f32.mrb[0].mxu0
    %123 = vdwg.mxu0
    %vm124 = vcmask 64512
    %v125 = vsel %vm124, %v116, -inf
    %126 = vmax.xlane.f32.xlu0 %v125
    %v127 = vpop.xlane.xlu0 %126
    %v128 = vsel %vm124, %v121, -inf
    %129 = vmax.xlane.f32.xlu0 %v128
    %v130 = vpop.xlane.xlu0 %129
    %v131 = vsub.f32 %v116, %v127
    %v132 = vsub.f32 %v121, %v130
    %v133 = vmul.f32 %v131, 1.442695
    %v134 = vpow.pop %v133
    %v135 = vmul.f32 %v132, 1.442695
    %v136 = vpow.pop %v135
    %v137 = vsel %vm124, %v134, 0.0
    %138 = vadd.xlane.f32.xlu0 %v137
    %v139 = vpop.xlane.xlu0 %138
    %v140 = vsel %vm124, %v136, 0.0
    %141 = vadd.xlane.f32.xlu0 %v140
    %v142 = vpop.xlane.xlu0 %141
    %v143 = vrcp.pop %v139
    %v144 = vmul.f32 %v134, %v143
    %v145 = vrcp.pop %v142
    %v146 = vmul.f32 %v136, %v145
    %v147 = vld [vmem:[#allocation2] sm:$0xff]
    %v148 = vld [vmem:[#allocation2 + $0x8] sm:$0xff]
    %v149 = vld [vmem:[#allocation2 + $0x10] sm:$0xff]
    %v150 = vld [vmem:[#allocation2 + $0x18] sm:$0xff]
    %v151 = vld [vmem:[#allocation2 + $0x20] sm:$0xff]
    %v152 = vld [vmem:[#allocation2 + $0x28] sm:$0xff]
    %v153 = vld [vmem:[#allocation2 + $0x30] sm:$0xff]
    %v154 = vld [vmem:[#allocation2 + $0x38] sm:$0xff]
    %v155 = vld [vmem:[#allocation2 + $0x40] sm:$0xff]
    %v156 = vld [vmem:[#allocation2 + $0x48] sm:$0xff]
    %v157 = vld [vmem:[#allocation2 + $0x50] sm:$0xff]
    %v158 = vld [vmem:[#allocation2 + $0x58] sm:$0xff]
    %v159 = vld [vmem:[#allocation2 + $0x60] sm:$0xff]
    %v160 = vld [vmem:[#allocation2 + $0x68] sm:$0xff]
    %v161 = vld [vmem:[#allocation2 + $0x70] sm:$0xff]
    %v162 = vld [vmem:[#allocation2 + $0x78] sm:$0xff]
    %163 = vmatprep.subr.mxu0 %v148
    %164 = vmatpush1.msra.mxu0 %v147
    %165 = vmatprep.subr.mxu0 %v150
    %166 = vmatpush1.msra.mxu0 %v149
    %167 = vmatprep.subr.mxu0 %v152
    %168 = vmatpush1.msra.mxu0 %v151
    %169 = vmatprep.subr.mxu0 %v154
    %170 = vmatpush1.msra.mxu0 %v153
    %171 = vmatprep.subr.mxu0 %v156
    %172 = vmatpush1.msra.mxu0 %v155
    %173 = vmatprep.subr.mxu0 %v158
    %174 = vmatpush1.msra.mxu0 %v157
    %175 = vmatprep.subr.mxu0 %v160
    %176 = vmatpush1.msra.mxu0 %v159
    %177 = vmatprep.subr.mxu0 %v162
    %178 = vmatpush1.msra.mxu0 %v161
    %179 = vmatprep.subr.mxu0 0.0
    %180 = vmatpush1.msra.mxu0 0.0
    %181 = vmatprep.subr.mxu0 0.0
    %182 = vmatpush1.msra.mxu0 0.0
    %183 = vmatprep.subr.mxu0 0.0
    %184 = vmatpush1.msra.mxu0 0.0
    %185 = vmatprep.subr.mxu0 0.0
    %186 = vmatpush1.msra.mxu0 0.0
    %187 = vmatprep.subr.mxu0 0.0
    %188 = vmatpush1.msra.mxu0 0.0
    %189 = vmatprep.subr.mxu0 0.0
    %190 = vmatpush1.msra.mxu0 0.0
    %191 = vmatprep.subr.mxu0 0.0
    %192 = vmatpush1.msra.mxu0 0.0
    %193 = vmatprep.subr.mxu0 0.0
    %194 = vmatpush1.msra.mxu0 0.0
    %195 = vmatprep.subr.mxu0 0.0
    %196 = vmatpush1.msra.mxu0 0.0
    %197 = vmatprep.subr.mxu0 0.0
    %198 = vmatpush1.msra.mxu0 0.0
    %199 = vmatprep.subr.mxu0 0.0
    %200 = vmatpush1.msra.mxu0 0.0
    %201 = vmatprep.subr.mxu0 0.0
    %202 = vmatpush1.msra.mxu0 0.0
    %203 = vmatprep.subr.mxu0 0.0
    %204 = vmatpush1.msra.mxu0 0.0
    %205 = vmatprep.subr.mxu0 0.0
    %206 = vmatpush1.msra.mxu0 0.0
    %207 = vmatprep.subr.mxu0 0.0
    %208 = vmatpush1.msra.mxu0 0.0
    %209 = vmatprep.subr.mxu0 0.0
    %210 = vmatpush1.msra.mxu0 0.0
    %211 = vmatprep.subr.mxu0 0.0
    %212 = vmatpush1.msra.mxu0 0.0
    %213 = vmatprep.subr.mxu0 0.0
    %214 = vmatpush1.msra.mxu0 0.0
    %215 = vmatprep.subr.mxu0 0.0
    %216 = vmatpush1.msra.mxu0 0.0
    %217 = vmatprep.subr.mxu0 0.0
    %218 = vmatpush1.msra.mxu0 0.0
    %219 = vmatprep.subr.mxu0 0.0
    %220 = vmatpush1.msra.mxu0 0.0
    %221 = vmatprep.subr.mxu0 0.0
    %222 = vmatpush1.msra.mxu0 0.0
    %223 = vmatprep.subr.mxu0 0.0
    %224 = vmatpush1.msra.mxu0 0.0
    %225 = vmatprep.subr.mxu0 0.0
    %226 = vmatpush1.msra.mxu0 0.0
    %227 = vmatprep.mubr.f32.mxu0 0.0
    %228 = vmatmul.mubr.f32.gmra.mrb[0].mxu0 %v44
    %v229 = vpop.f32.mrb[0].mxu0
    %v230 = vadd.f32 0.0, %v229
    %v231 = vpop.f32.mrb[0].mxu0
    %v232 = vadd.f32 0.0, %v231
    %233 = vmatprep.mubr.f32.mxu0 0.0
    %234 = vmatmul.mubr.f32.gmra.mrb[0].mxu0 %v47
    %v235 = vpop.f32.mrb[0].mxu0
    %v236 = vadd.f32 0.0, %v235
    %v237 = vpop.f32.mrb[0].mxu0
    %v238 = vadd.f32 0.0, %v237
    %239 = vdwg.mxu0
    %v240 = vld [vmem:[%s3] sm:$0x3]
    %v242 = vlaneseq
    %v243 = vshrl.u32 %v242, 7
    %v244 = vsub.s32 0, %v243
    %v245 = vrot.slane %v240, %v244
    %v246 = vlaneseq
    %v247 = vshrl.u32 %v246, 7
    %v248 = vsub.s32 1, %v247
    %v249 = vrot.slane %v240, %v248
    %v252 = vsub.f32 %v230, %v245
    %v253 = vsub.f32 %v232, %v249
    %v254 = vsub.f32 %v236, %v245
    %v255 = vsub.f32 %v238, %v249
    %257 = vset.pattern.permute.xlu0 0
    %258 = vperm.xlu0 %257, %v144
    %v259 = vpop.permute.xlu0 %258
    %262 = vset.pattern.permute.xlu0 0
    %263 = vperm.xlu0 %262, %v146
    %v264 = vpop.permute.xlu0 %263
    %v266 = vmul.f32 %v259, %v252
    %v267 = vmul.f32 %v264, %v254
    %268 = vset.pattern.permute.xlu0 1
    %269 = vperm.xlu0 %268, %v144
    %v270 = vpop.permute.xlu0 %269
    %272 = vset.pattern.permute.xlu0 1
    %273 = vperm.xlu0 %272, %v146
    %v274 = vpop.permute.xlu0 %273
    %v276 = vmul.f32 %v270, %v252
    %v277 = vmul.f32 %v274, %v254
    %280 = vrot.lane.b32.xlu0 %v276, 96
    %v281 = vpop.permute.xlu0 %280
    %282 = vrot.lane.b32.xlu0 %v277, 96
    %v283 = vpop.permute.xlu0 %282
    %v286 = vadd.f32 %v266, %v281
    %v287 = vadd.f32 %v267, %v283
    %288 = vset.pattern.permute.xlu0 2
    %289 = vperm.xlu0 %288, %v144
    %v290 = vpop.permute.xlu0 %289
    %292 = vset.pattern.permute.xlu0 2
    %293 = vperm.xlu0 %292, %v146
    %v294 = vpop.permute.xlu0 %293
    %v296 = vmul.f32 %v290, %v252
    %v297 = vmul.f32 %v294, %v254
    %300 = vrot.lane.b32.xlu0 %v296, 64
    %v301 = vpop.permute.xlu0 %300
    %302 = vrot.lane.b32.xlu0 %v297, 64
    %v303 = vpop.permute.xlu0 %302
    %v306 = vadd.f32 %v286, %v301
    %v307 = vadd.f32 %v287, %v303
    %308 = vset.pattern.permute.xlu0 3
    %309 = vperm.xlu0 %308, %v144
    %v310 = vpop.permute.xlu0 %309
    %312 = vset.pattern.permute.xlu0 3
    %313 = vperm.xlu0 %312, %v146
    %v314 = vpop.permute.xlu0 %313
    %v316 = vmul.f32 %v310, %v252
    %v317 = vmul.f32 %v314, %v254
    %320 = vrot.lane.b32.xlu0 %v316, 32
    %v321 = vpop.permute.xlu0 %320
    %322 = vrot.lane.b32.xlu0 %v317, 32
    %v323 = vpop.permute.xlu0 %322
    %v326 = vadd.f32 %v306, %v321
    %v327 = vadd.f32 %v307, %v323
    %328 = vset.pattern.permute.xlu0 4
    %329 = vperm.xlu0 %328, %v144
    %v330 = vpop.permute.xlu0 %329
    %332 = vset.pattern.permute.xlu0 4
    %333 = vperm.xlu0 %332, %v146
    %v334 = vpop.permute.xlu0 %333
    %v336 = vmul.f32 %v330, %v253
    %v337 = vmul.f32 %v334, %v255
    %v338 = vadd.f32 %v326, %v336
    %v339 = vadd.f32 %v327, %v337
    %340 = vset.pattern.permute.xlu0 5
    %341 = vperm.xlu0 %340, %v144
    %v342 = vpop.permute.xlu0 %341
    %344 = vset.pattern.permute.xlu0 5
    %345 = vperm.xlu0 %344, %v146
    %v346 = vpop.permute.xlu0 %345
    %v348 = vmul.f32 %v342, %v253
    %v349 = vmul.f32 %v346, %v255
    %352 = vrot.lane.b32.xlu0 %v348, 96
    %v353 = vpop.permute.xlu0 %352
    %354 = vrot.lane.b32.xlu0 %v349, 96
    %v355 = vpop.permute.xlu0 %354
    %v358 = vadd.f32 %v338, %v353
    %v359 = vadd.f32 %v339, %v355
    %360 = vset.pattern.permute.xlu0 6
    %361 = vperm.xlu0 %360, %v144
    %v362 = vpop.permute.xlu0 %361
    %364 = vset.pattern.permute.xlu0 6
    %365 = vperm.xlu0 %364, %v146
    %v366 = vpop.permute.xlu0 %365
    %v368 = vmul.f32 %v362, %v253
    %v369 = vmul.f32 %v366, %v255
    %372 = vrot.lane.b32.xlu0 %v368, 64
    %v373 = vpop.permute.xlu0 %372
    %374 = vrot.lane.b32.xlu0 %v369, 64
    %v375 = vpop.permute.xlu0 %374
    %v378 = vadd.f32 %v358, %v373
    %v379 = vadd.f32 %v359, %v375
    %380 = vset.pattern.permute.xlu0 7
    %381 = vperm.xlu0 %380, %v144
    %v382 = vpop.permute.xlu0 %381
    %384 = vset.pattern.permute.xlu0 7
    %385 = vperm.xlu0 %384, %v146
    %v386 = vpop.permute.xlu0 %385
    %v388 = vmul.f32 %v382, %v253
    %v389 = vmul.f32 %v386, %v255
    %392 = vrot.lane.b32.xlu0 %v388, 32
    %v393 = vpop.permute.xlu0 %392
    %394 = vrot.lane.b32.xlu0 %v389, 32
    %v395 = vpop.permute.xlu0 %394
    %v398 = vadd.f32 %v378, %v393
    %v399 = vadd.f32 %v379, %v395
    %vm400 = vcmask 261120
    %401 = vst.msk [vmem:[#allocation5] sm:$0xff] %vm400, %v398
    %402 = vst.msk [vmem:[#allocation5 + $0x8] sm:$0xff] %vm400, %v399
    // Predicated region
    $region22: #{tpu_custom_call.1} parent=1 // pred_check
      _
    $region23: #{tpu_custom_call.1} parent=1 // pred_check_branch
      %404 = sbr.rel (0) target = $region25
    $region24: #{tpu_custom_call.1} parent=1 // pred_region
      %s406 = ssub.s32 256, 256
      %407 = vsyncadd [#allocation4], %s406
      %s408 = sshll.u32 [#allocation5], 4
      %s409 = int_to_ptr.vmem [resolvable:$true] %s408
      %414 = dma.vmem_to_hbm [thread:$0]  %s409, 256, %s4, [#allocation4], 128, 128, 8
    $region25: #{tpu_custom_call.1} parent=1 // pred_fallthru
      _
    // Predicated region
    $region26: #{tpu_custom_call.1} parent=1 // pred_check
      _
    $region27: #{tpu_custom_call.1} parent=1 // pred_check_branch
      %416 = sbr.rel (0) target = $region29
    $region28: #{tpu_custom_call.1} parent=1 // pred_region
      %417 = dma.done [#allocation4], 256
    $region29: #{tpu_custom_call.1} parent=1 // pred_fallthru
      _
    %418 = vsyncpa [#allocation3], 1
    %419 = vsyncpa [#allocation4], 1

</llo_original>
